<compile_context>
chip_gen: v7x
topology: tpu7x:2x2x1
jax: 0.10.0
libtpu: 0.0.40
codegen_flags: <defaults>
</compile_context>

<pallas_src>
import jax
import jax.numpy as jnp
from jax.experimental import pallas as pl
from jax.experimental.pallas import tpu as pltpu


def _round_up(v, m):
    return ((v + m - 1) // m) * m


def mlp_kernel(x_ref, w1t_ref, bw_ref, b2_ref, out_ref):
    """One batch tile; batch lives on the lane (last) axis of h and the output.

    x_ref  : (tb, in_features) f32   -- x tile, streamed straight from HBM
    w1t_ref: (H, in_features)  bf16  -- W1^T, VMEM-resident (constant index_map)
    bw_ref : (H, 2)            f32   -- column 0 = b1, column 1 = w2 (resident)
    b2_ref : (1,)              f32   -- SMEM scalar
    out_ref: (1, tb)           f32   -- sigmoid(logits)^T, lane-dense store
    """
    # Cast the x tile to the matmul dtype on the VPU (cheap; huge VALU slack)
    # instead of a wrapper-side HBM pre-pass over x.
    x_t = x_ref[...].astype(w1t_ref.dtype)

    # Layer 1 on the MXU with an rhs-transposed ("NT") contraction:
    #   (H, in) . (tb, in)^T -> (H, tb), f32 accumulation.
    # Same dimension_numbers pattern as q @ k^T in the Pallas attention kernels.
    h = jax.lax.dot_general(
        w1t_ref[...], x_t,
        dimension_numbers=(((1,), (1,)), ((), ())),
        preferred_element_type=jnp.float32,
    )

    bw = bw_ref[...]
    b1 = bw[:, 0:1]   # (H, 1)
    w2 = bw[:, 1:2]   # (H, 1)

    # Bias + ReLU on the VPU in f32 (v5e-safe).
    # v7x note: if VALU slot_util shows this binding, fold b1 into the matmul
    # (augment W1^T with a bias column + ones row) -- neutral on v5e/v6e.
    h = jnp.maximum(h + b1, 0.0)

    # Layer 2 (H -> 1): VPU multiply + sublane reduction (MXU would be wasted
    # on a 1-row matmul), then the scalar bias from SMEM.
    logits = jnp.sum(h * w2, axis=0, keepdims=True) + b2_ref[0]

    # Lane-dense store: batch on the 128-lane axis. (Output could be emitted as
    # bf16 if the consumer accepts it -- kept f32 for module parity.)
    out_ref[...] = jax.nn.sigmoid(logits).astype(out_ref.dtype)


def neural_net1_forward(x, w1, b1, w2, b2, *, block_b=16384,
                        matmul_dtype=jnp.bfloat16):
    """sigmoid(relu(x @ w1 + b1) @ w2 + b2), identical math to NeuralNet1.

    x : (B, input_size) f32
    w1: (input_size, H) f32   (transposed vs. torch nn.Linear.weight)
    b1: (H,)            f32
    w2: (H, 1)          f32
    b2: ()              f32
    returns (B, 1) f32
    """
    x = jnp.asarray(x, jnp.float32)
    B, in_features = x.shape
    H = w1.shape[1]
    orig_b = B

    # ---- batch tile selection -------------------------------------------
    # Large tiles amortize the ~0.35 us per-grid-step overhead (~1 MiB of x per
    # step at tb=16384 with in_features=16), while the ceil(B/2) cap keeps at
    # least 2 (load-balanced) tiles so v7x's two TensorCores both get work.
    # Multiple of 512 keeps the (1, tb) output lane-dense and the (tb, in)
    # x block sublane-aligned.  VMEM/step stays well under every generation's
    # scoped limit (~9 MiB at tb=16384).
    tb = max(512, min(block_b, _round_up(pl.cdiv(B, 2), 512)))
    if B < tb:
        # Tiny batches (launch-overhead regime anyway): pad rows so the single
        # block fits; for large B this branch is never taken (no copy of x).
        x = jnp.pad(x, ((0, tb - B), (0, 0)))
        B = tb
    num_tiles = pl.cdiv(B, tb)
    b_out = num_tiles * tb

    # ---- tiny, resident parameters --------------------------------------
    w1t = jnp.asarray(w1, jnp.float32).T.astype(matmul_dtype)        # (H, in)
    bw = jnp.stack([jnp.asarray(b1, jnp.float32).reshape(H),
                    jnp.asarray(w2, jnp.float32).reshape(H)], axis=1)  # (H, 2)
    b2_s = jnp.asarray(b2, jnp.float32).reshape(1)                    # (1,)

    out_t = pl.pallas_call(
        mlp_kernel,
        out_shape=jax.ShapeDtypeStruct((1, b_out), jnp.float32),
        grid=(num_tiles,),
        in_specs=[
            # x: streamed batch tiles, straight from HBM in f32.
            # (Add pipeline_mode=pl.Buffered(3) here only if xprof shows
            #  exposed DMA on this stream.)
            pl.BlockSpec((tb, in_features), lambda i: (i, 0)),
            # W1^T: VMEM-resident across the whole grid.
            pl.BlockSpec((H, in_features), lambda i: (0, 0)),
            # [b1 | w2]: single resident block.
            pl.BlockSpec((H, 2), lambda i: (0, 0)),
            # b2: scalar path.
            pl.BlockSpec(memory_space=pltpu.MemorySpace.SMEM),
        ],
        out_specs=pl.BlockSpec((1, tb), lambda i: (0, i)),
        compiler_params=pltpu.CompilerParams(
            # Independent batch tiles -> sharded across both TCs on v7x,
            # harmless no-op on v5e/v6e.
            dimension_semantics=("parallel",),
            # Generous but safe on every generation (v5e default is only 16 MiB).
            vmem_limit_bytes=32 * 1024 * 1024,
        ),
    )(x, w1t, bw, b2_s)

    return out_t[0, :orig_b].reshape(orig_b, 1)


if __name__ == "__main__":
    # Small shapes consistent with the module's forward: x is (batch, input_size).
    # batch=1000 exercises the multi-tile path (2 tiles of 512) including a
    # masked partial edge block on both the x read and the output slice.
    batch, input_size, hidden_size = 1000, 16, 32

    key = jax.random.PRNGKey(0)
    kx, kw1, kb1, kw2, kb2 = jax.random.split(key, 5)

    x = jax.random.normal(kx, (batch, input_size), dtype=jnp.float32)

    # Deterministic parameter init (PyTorch-style uniform bounds, synthetic values).
    bound1 = 1.0 / (input_size ** 0.5)
    w1 = jax.random.uniform(kw1, (input_size, hidden_size), jnp.float32, -bound1, bound1)
    b1 = jax.random.uniform(kb1, (hidden_size,), jnp.float32, -bound1, bound1)

    bound2 = 1.0 / (hidden_size ** 0.5)
    w2 = jax.random.uniform(kw2, (hidden_size, 1), jnp.float32, -bound2, bound2)
    b2 = jax.random.uniform(kb2, (), jnp.float32, -bound2, bound2)

    out = neural_net1_forward(x, w1, b1, w2, b2)
    jax.block_until_ready(out)
    assert out.shape == (batch, 1)

    # Reference 1: same bf16 operand rounding as the kernel (tight check).
    xb = x.astype(jnp.bfloat16)
    w1b = w1.astype(jnp.bfloat16)
    h_ref = jnp.maximum(
        jnp.dot(xb, w1b, preferred_element_type=jnp.float32) + b1, 0.0)
    ref_bf16 = jax.nn.sigmoid(h_ref @ w2 + b2)
    assert jnp.allclose(out, ref_bf16, atol=2e-5, rtol=1e-5), \
        float(jnp.max(jnp.abs(out - ref_bf16)))

    # Reference 2: pure-f32 module semantics (loose check: bf16 operand rounding only).
    ref_f32 = jax.nn.sigmoid(jnp.maximum(x @ w1 + b1, 0.0) @ w2 + b2)
    assert jnp.allclose(out, ref_f32, atol=5e-3, rtol=0.0), \
        float(jnp.max(jnp.abs(out - ref_f32)))

    print("KERNEL_OK")
</pallas_src>

<mosaic_0001>
module attributes {stable_mosaic.version = 11 : i64} {
  func.func @mlp_kernel(%arg0: i32, %arg1: memref<512x16xf32, #tpu.memory_space<vmem>>, %arg2: memref<32x16xbf16, #tpu.memory_space<vmem>>, %arg3: memref<32x2xf32, #tpu.memory_space<vmem>>, %arg4: memref<1xf32, #tpu.memory_space<smem>>, %arg5: memref<1x512xf32, #tpu.memory_space<vmem>>) attributes {dimension_semantics = [#tpu.dimension_semantics<parallel>], iteration_bounds = array<i64: 2>, scalar_prefetch = 0 : i64, scratch_operands = 0 : i64, tpu.core_type = #tpu.core_type<tc>, window_params = [{transform_indices = @transform_0, window_bounds = array<i64: 512, 16>}, {pipeline_mode = #tpu.pipeline_mode<synchronous>, transform_indices = @transform_1, window_bounds = array<i64: 32, 16>}, {pipeline_mode = #tpu.pipeline_mode<synchronous>, transform_indices = @transform_2, window_bounds = array<i64: 32, 2>}, {transform_indices = @transform_3, window_bounds = array<i64: 1>}, {transform_indices = @transform_4, window_bounds = array<i64: 1, 512>}]} {
    %c0 = arith.constant 0 : index
    %c0_0 = arith.constant 0 : index
    %0 = vector.load %arg1[%c0, %c0_0] : memref<512x16xf32, #tpu.memory_space<vmem>>, vector<512x16xf32>
    %1 = arith.truncf %0 : vector<512x16xf32> to vector<512x16xbf16>
    %c0_1 = arith.constant 0 : index
    %c0_2 = arith.constant 0 : index
    %2 = vector.load %arg2[%c0_1, %c0_2] : memref<32x16xbf16, #tpu.memory_space<vmem>>, vector<32x16xbf16>
    %cst = arith.constant dense<0.000000e+00> : vector<32x512xf32>
    %3 = tpu.matmul %2, %1, %cst {dimension_numbers = #tpu.dot_dimension_numbers<[1], [1], [0], [0], [0, 0, 1, 0], [], []>} : vector<32x16xbf16>, vector<512x16xbf16>, vector<32x512xf32> -> vector<32x512xf32>
    %c0_3 = arith.constant 0 : index
    %c0_4 = arith.constant 0 : index
    %4 = vector.load %arg3[%c0_3, %c0_4] : memref<32x2xf32, #tpu.memory_space<vmem>>, vector<32x2xf32>
    %5 = vector.extract_strided_slice %4 {offsets = [0, 0], sizes = [32, 1], strides = [1, 1]} : vector<32x2xf32> to vector<32x1xf32>
    %6 = vector.extract_strided_slice %4 {offsets = [0, 1], sizes = [32, 1], strides = [1, 1]} : vector<32x2xf32> to vector<32x1xf32>
    %7 = vector.broadcast %5 : vector<32x1xf32> to vector<32x512xf32>
    %8 = arith.addf %3, %7 : vector<32x512xf32>
    %cst_5 = arith.constant 0.000000e+00 : f32
    %9 = vector.broadcast %cst_5 : f32 to vector<32x512xf32>
    %10 = arith.maximumf %8, %9 : vector<32x512xf32>
    %11 = vector.broadcast %6 : vector<32x1xf32> to vector<32x512xf32>
    %12 = arith.mulf %10, %11 : vector<32x512xf32>
    %cst_6 = arith.constant dense<0.000000e+00> : vector<512xf32>
    %13 = vector.multi_reduction <add>, %12, %cst_6 [0] : vector<32x512xf32> to vector<512xf32>
    %14 = vector.shape_cast %13 : vector<512xf32> to vector<1x512xf32>
    %c0_7 = arith.constant 0 : index
    %15 = memref.load %arg4[%c0_7] : memref<1xf32, #tpu.memory_space<smem>>
    %16 = vector.broadcast %15 : f32 to vector<1x512xf32>
    %17 = arith.addf %14, %16 : vector<1x512xf32>
    %18 = arith.negf %17 : vector<1x512xf32>
    %19 = math.exp %18 : vector<1x512xf32>
    %cst_8 = arith.constant 1.000000e+00 : f32
    %20 = vector.broadcast %cst_8 : f32 to vector<1x512xf32>
    %21 = arith.addf %20, %19 : vector<1x512xf32>
    %22 = arith.divf %20, %21 : vector<1x512xf32>
    %c0_9 = arith.constant 0 : index
    %c0_10 = arith.constant 0 : index
    %23 = vector.load %arg5[%c0_9, %c0_10] : memref<1x512xf32, #tpu.memory_space<vmem>>, vector<1x512xf32>
    tpu.vector_store %arg5[%c0_9, %c0_10], %22 {strides = array<i32>} : memref<1x512xf32, #tpu.memory_space<vmem>>, vector<1x512xf32>,
    return
  }
  func.func @transform_0(%arg0: i32) -> (i32, i32) {
    %c0_i32 = arith.constant 0 : i32
    %c0_i32_0 = arith.constant 0 : i32
    return %arg0, %c0_i32 : i32, i32
  }
  func.func @transform_1(%arg0: i32) -> (i32, i32) {
    %c0_i32 = arith.constant 0 : i32
    %c0_i32_0 = arith.constant 0 : i32
    %c0_i32_1 = arith.constant 0 : i32
    return %c0_i32, %c0_i32_0 : i32, i32
  }
  func.func @transform_2(%arg0: i32) -> (i32, i32) {
    %c0_i32 = arith.constant 0 : i32
    %c0_i32_0 = arith.constant 0 : i32
    %c0_i32_1 = arith.constant 0 : i32
    return %c0_i32, %c0_i32_0 : i32, i32
  }
  func.func @transform_3(%arg0: i32) -> i32 {
    %c0_i32 = arith.constant 0 : i32
    %c0_i32_0 = arith.constant 0 : i32
    return %c0_i32 : i32
  }
  func.func @transform_4(%arg0: i32) -> (i32, i32) {
    %c0_i32 = arith.constant 0 : i32
    %c0_i32_0 = arith.constant 0 : i32
    return %c0_i32, %arg0 : i32, i32
  }
}

</mosaic_0001>

<llo_original>
// kernel: tpu_custom_call.1
$region0: #{tpu_custom_call.1}
  #allocation0 [shape = 'u32[]', space=smem, size = 0x4, offset = 0x4, fixed_abs, tag = 'smem constant byte address 0x4 - core index']
  #allocation1 [shape = 'u32[144,128]{1,0:T(1,128)}', space=vmem, size = 0x12000, scoped, tag = 'internal scratch']
  #allocation2 [shape = 'f32[1]{0:T(128)S(6)}', space=smem, size = 0x200, scoped, tag = 'scoped memory for tpu_custom_call.1']
  %s0 = inlined_call_operand.vmem [shape: f32[1000,16], index: 0, kind: input, shape index: {}]
  %s1 = inlined_call_operand.vmem [shape: bf16[32,16], index: 1, kind: input, shape index: {}]
  %s2 = inlined_call_operand.vmem [shape: f32[32,2], index: 2, kind: input, shape index: {}]
  %s3 = inlined_call_operand.<no memory space> [shape: f32[1], index: 3, kind: input, shape index: {}]
  %s4 = inlined_call_operand.hbm [shape: f32[1,1024], index: 4, kind: output, shape index: {}]
  %s5 = sld [smem:[#allocation0]]
  $region49: #{tpu_custom_call.1} parent=0
    _
  %s7 = ssub.s32 1, %s5
  %s8 = scalar_select 0, %s7, %s5
  %9 = sst [smem:[#allocation2]] %s3
  $region1: #{tpu_custom_call.1} parent=0
    #allocation3 [shape = 'u8[4096]{0}', space=vmem, size = 0x1000, scoped, tag = 'output window, operand 0']
    #allocation4 [shape = 's32[2]{0}', space=sflag, size = 0x8, scoped, tag = 'scoped memory for tpu_custom_call.1']
    %10 = vsyncpa [#allocation4], 0
    %s11 = scalar_lea.sflag [#allocation4], 1
    %12 = vsyncpa %s11, 0
    loop: start=0, step=1, limit=4
    $region2: #{tpu_custom_call.1} parent=1 // loop_pre_header
      _
    $region3: #{tpu_custom_call.1} parent=1 // loop_header
      %s14 = sphi 0, %s18
      %p15 = scmp.ge.s32.totalorder %s14, 4
      %s24 = sphi 0, %s26
      %s27 = sphi 0, %s24
      %s28 = sphi 0, %s27
      %s44 = sphi 0, %s28
      %s48 = sphi 0, %s48
      %s50 = sphi 0, %s48
      %s51 = sphi 0, %s50
      %s65 = sphi 0, %s51
      %s69 = sphi 0, %s69
      %s71 = sphi 0, %s69
      %s72 = sphi 0, %s71
      %s86 = sphi 0, %s72
      %s90 = sphi 0, %s90
      %s92 = sphi 0, %s90
      %s93 = sphi 0, %s92
      %s107 = sphi 0, %s93
      %s113 = sphi 0, %s115
      %s116 = sphi 0, %s113
      %s117 = sphi 0, %s116
      %s133 = sphi 0, %s117
    $region4: #{tpu_custom_call.1} parent=1 // loop_header_branch
      %17 = sbr.rel (%p15) target = $region8
    $region5: #{tpu_custom_call.1} parent=1 // loop_body
      %s19 = ssub.s32 %s14, 1
      %s20 = ssub.s32 %s14, 2
      %s21 = sadd.s32 %s14, 1
      %s22 = ssub.s32 %s14, %s21
      %p23 = scmp.eq.s32.totalorder %s22, 0
      %s25 = sadd.s32 %s24, 1
      %s26 = scalar_select %p23, %s24, %s25
      %p29 = pneg %p23
      %p30 = scmp.eq.s32.totalorder %s14, 1
      %p31 = por %p29, %p30
      %p32 = scmp.ne.s32.totalorder %s24, %s27
      %p33 = scmp.eq.s32.totalorder %s14, 0
      %p34 = por %p32, %p33
      %p35 = scmp.ne.s32.totalorder %s24, %s27
      %p36 = scmp.eq.s32.totalorder %s19, 1
      %p37 = por %p35, %p36
      %p38 = scmp.ne.s32.totalorder %s27, %s28
      %p39 = scmp.eq.s32.totalorder %s19, 0
      %p40 = por %p38, %p39
      %p41 = scmp.ne.s32.totalorder %s27, %s28
      %p42 = scmp.eq.s32.totalorder %s20, 1
      %p43 = por %p41, %p42
      %p45 = scmp.ne.s32.totalorder %s28, %s44
      %p46 = scmp.eq.s32.totalorder %s20, 0
      %p47 = por %p45, %p46
      %s49 = sadd.s32 %s48, 1
      %p52 = scmp.eq.s32.totalorder %s14, 1
      %p53 = scmp.ne.s32.totalorder %s48, %s50
      %p54 = scmp.eq.s32.totalorder %s14, 0
      %p55 = por %p53, %p54
      %p56 = scmp.ne.s32.totalorder %s48, %s50
      %p57 = scmp.eq.s32.totalorder %s19, 1
      %p58 = por %p56, %p57
      %p59 = scmp.ne.s32.totalorder %s50, %s51
      %p60 = scmp.eq.s32.totalorder %s19, 0
      %p61 = por %p59, %p60
      %p62 = scmp.ne.s32.totalorder %s50, %s51
      %p63 = scmp.eq.s32.totalorder %s20, 1
      %p64 = por %p62, %p63
      %p66 = scmp.ne.s32.totalorder %s51, %s65
      %p67 = scmp.eq.s32.totalorder %s20, 0
      %p68 = por %p66, %p67
      %s70 = sadd.s32 %s69, 1
      %p73 = scmp.eq.s32.totalorder %s14, 1
      %p74 = scmp.ne.s32.totalorder %s69, %s71
      %p75 = scmp.eq.s32.totalorder %s14, 0
      %p76 = por %p74, %p75
      %p77 = scmp.ne.s32.totalorder %s69, %s71
      %p78 = scmp.eq.s32.totalorder %s19, 1
      %p79 = por %p77, %p78
      %p80 = scmp.ne.s32.totalorder %s71, %s72
      %p81 = scmp.eq.s32.totalorder %s19, 0
      %p82 = por %p80, %p81
      %p83 = scmp.ne.s32.totalorder %s71, %s72
      %p84 = scmp.eq.s32.totalorder %s20, 1
      %p85 = por %p83, %p84
      %p87 = scmp.ne.s32.totalorder %s72, %s86
      %p88 = scmp.eq.s32.totalorder %s20, 0
      %p89 = por %p87, %p88
      %s91 = sadd.s32 %s90, 1
      %p94 = scmp.eq.s32.totalorder %s14, 1
      %p95 = scmp.ne.s32.totalorder %s90, %s92
      %p96 = scmp.eq.s32.totalorder %s14, 0
      %p97 = por %p95, %p96
      %p98 = scmp.ne.s32.totalorder %s90, %s92
      %p99 = scmp.eq.s32.totalorder %s19, 1
      %p100 = por %p98, %p99
      %p101 = scmp.ne.s32.totalorder %s92, %s93
      %p102 = scmp.eq.s32.totalorder %s19, 0
      %p103 = por %p101, %p102
      %p104 = scmp.ne.s32.totalorder %s92, %s93
      %p105 = scmp.eq.s32.totalorder %s20, 1
      %p106 = por %p104, %p105
      %p108 = scmp.ne.s32.totalorder %s93, %s107
      %p109 = scmp.eq.s32.totalorder %s20, 0
      %p110 = por %p108, %p109
      %s111 = ssub.s32 %s14, %s21
      %p112 = scmp.eq.s32.totalorder %s111, 0
      %s114 = sadd.s32 %s113, 1
      %s115 = scalar_select %p112, %s113, %s114
      %p118 = pneg %p112
      %p119 = scmp.eq.s32.totalorder %s14, 1
      %p120 = por %p118, %p119
      %p121 = scmp.ne.s32.totalorder %s113, %s116
      %p122 = scmp.eq.s32.totalorder %s14, 0
      %p123 = por %p121, %p122
      %p124 = scmp.ne.s32.totalorder %s113, %s116
      %p125 = scmp.eq.s32.totalorder %s19, 1
      %p126 = por %p124, %p125
      %p127 = scmp.ne.s32.totalorder %s116, %s117
      %p128 = scmp.eq.s32.totalorder %s19, 0
      %p129 = por %p127, %p128
      %p130 = scmp.ne.s32.totalorder %s116, %s117
      %p131 = scmp.eq.s32.totalorder %s20, 1
      %p132 = por %p130, %p131
      %p134 = scmp.ne.s32.totalorder %s117, %s133
      %p135 = scmp.eq.s32.totalorder %s20, 0
      %p136 = por %p134, %p135
      %p137 = scmp.le.s32.totalorder 1, %s14
      %p138 = scmp.lt.s32.totalorder %s14, 3
      %p139 = pnand %p137, %p138
      %p140 = pneg %p139
      // Predicated region
      $region9: #{tpu_custom_call.1} parent=5 // pred_check
        _
      $region10: #{tpu_custom_call.1} parent=5 // pred_check_branch
        %142 = sbr.rel (%p139) target = $region12
      $region11: #{tpu_custom_call.1} parent=5 // pred_region
        %s143 = ssub.s32 %s14, 1
        // Predicated region
        $region13: #{tpu_custom_call.1} parent=11 // pred_check
          %p144 = pneg %p61
        $region14: #{tpu_custom_call.1} parent=11 // pred_check_branch
          %146 = sbr.rel (%p144) target = $region16
        $region15: #{tpu_custom_call.1} parent=11 // pred_region
          _
        $region16: #{tpu_custom_call.1} parent=11 // pred_fallthru
          _
        // Predicated region
        $region17: #{tpu_custom_call.1} parent=11 // pred_check
          %p147 = pneg %p82
        $region18: #{tpu_custom_call.1} parent=11 // pred_check_branch
          %149 = sbr.rel (%p147) target = $region20
        $region19: #{tpu_custom_call.1} parent=11 // pred_region
          _
        $region20: #{tpu_custom_call.1} parent=11 // pred_fallthru
          _
        // Predicated region
        $region21: #{tpu_custom_call.1} parent=11 // pred_check
          %p150 = pneg %p103
        $region22: #{tpu_custom_call.1} parent=11 // pred_check_branch
          %152 = sbr.rel (%p150) target = $region24
        $region23: #{tpu_custom_call.1} parent=11 // pred_region
          _
        $region24: #{tpu_custom_call.1} parent=11 // pred_fallthru
          _
      $region12: #{tpu_custom_call.1} parent=5 // pred_fallthru
        _
      %p153 = scmp.lt.s32.totalorder %s14, 2
      // Predicated region
      $region25: #{tpu_custom_call.1} parent=5 // pred_check
        %p154 = pneg %p153
      $region26: #{tpu_custom_call.1} parent=5 // pred_check_branch
        %156 = sbr.rel (%p154) target = $region28
      $region27: #{tpu_custom_call.1} parent=5 // pred_region
        // Predicated region
        $region29: #{tpu_custom_call.1} parent=27 // pred_check
          %p157 = pneg %p34
        $region30: #{tpu_custom_call.1} parent=27 // pred_check_branch
          %159 = sbr.rel (%p157) target = $region32
        $region31: #{tpu_custom_call.1} parent=27 // pred_region
          %s160 = smul.u32 64, %s14
          %s161 = ssub.s32 125, %s160
          %p162 = scmp.lt.s32.totalorder %s161, 64
          %s163 = scalar_select %p162, %s161, 64
          %s164 = smul.u32 128, %s163
          %p165 = scmp.lt.s32.totalorder %s160, 124
          %s166 = scalar_select %p165, %s160, 124
          %s167 = smul.addr %s166, 8
          %s168 = scalar_lea.vmem %s0, %s167
          %s169 = smul.u32 64, %s14
          %s170 = ssub.s32 125, %s169
          %p171 = scmp.lt.s32.totalorder %s170, 64
          %s172 = scalar_select %p171, %s170, 64
          %s173 = smul.u32 128, %s172
        $region32: #{tpu_custom_call.1} parent=27 // pred_fallthru
          _
      $region28: #{tpu_custom_call.1} parent=5 // pred_fallthru
        _
      %p174 = scmp.le.s32.totalorder 1, %s14
      %p175 = scmp.lt.s32.totalorder %s14, 3
      %p176 = pnand %p174, %p175
      %p177 = pneg %p176
      // Predicated region
      $region33: #{tpu_custom_call.1} parent=5 // pred_check
        _
      $region34: #{tpu_custom_call.1} parent=5 // pred_check_branch
        %179 = sbr.rel (%p176) target = $region36
      $region35: #{tpu_custom_call.1} parent=5 // pred_region
        %s180 = ssub.s32 %s14, 1
        %s181 = smul.u32 64, %s19
        %s182 = ssub.s32 125, %s181
        %p183 = scmp.lt.s32.totalorder %s182, 64
        %s184 = scalar_select %p183, %s182, 64
        %s185 = smul.u32 128, %s184
        %p186 = scmp.lt.s32.totalorder %s181, 124
        %s187 = scalar_select %p186, %s181, 124
        %s188 = smul.addr %s187, 8
        %s189 = scalar_lea.vmem %s0, %s188
        %p190 = pneg %p40
        %p191 = pneg %p37
        %p192 = pneg %p61
        %p193 = pneg %p58
        %p194 = pneg %p82
        %p195 = pneg %p79
        %p196 = pneg %p103
        %p197 = pneg %p100
        %p198 = pneg %p129
        %p199 = pneg %p126
        %s200 = sand.u32 %s116, 1
        %s201 = scalar_lea.sflag [#allocation4], %s200
        %s202 = sand.u32 %s116, 1
        %s203 = smul.addr %s202, 4
        %s204 = scalar_lea.vmem [#allocation3], %s203
        %s205 = smul.u32 64, %s19
        %s206 = ssub.s32 125, %s205
        %p207 = scmp.lt.s32.totalorder %s206, 64
        %s208 = scalar_select %p207, %s206, 64
        %s209 = smul.u32 128, %s208
        %p210 = scmp.lt.s32.totalorder %s205, 124
        %s211 = scalar_select %p210, %s205, 124
        %s212 = smul.addr %s211, 8
        %s213 = scalar_lea.vmem %s0, %s212
        %s214 = smul.u32 64, %s19
        %s215 = ssub.s32 125, %s214
        %p216 = scmp.lt.s32.totalorder %s215, 64
        %s217 = scalar_select %p216, %s215, 64
        %s218 = smul.u32 128, %s217
        %s219 = smul.u32 4, %s19
        %v221 = vld [vmem:[%s213] sm:$0xff]
        %v222 = vld [vmem:[%s213 + $0x8] sm:$0xff]
        %v223 = vld [vmem:[%s213 + $0x10] sm:$0xff]
        %v224 = vld [vmem:[%s213 + $0x18] sm:$0xff]
        %v225 = vld [vmem:[%s213 + $0x20] sm:$0xff]
        %v226 = vld [vmem:[%s213 + $0x28] sm:$0xff]
        %v227 = vld [vmem:[%s213 + $0x30] sm:$0xff]
        %v228 = vld [vmem:[%s213 + $0x38] sm:$0xff]
        %v229 = vld [vmem:[%s213 + $0x40] sm:$0xff]
        %v230 = vld [vmem:[%s213 + $0x48] sm:$0xff]
        %v231 = vld [vmem:[%s213 + $0x50] sm:$0xff]
        %v232 = vld [vmem:[%s213 + $0x58] sm:$0xff]
        %v233 = vld [vmem:[%s213 + $0x60] sm:$0xff]
        %v234 = vld [vmem:[%s213 + $0x68] sm:$0xff]
        %v235 = vld [vmem:[%s213 + $0x70] sm:$0xff]
        %v236 = vld [vmem:[%s213 + $0x78] sm:$0xff]
        %v237 = vld [vmem:[%s213 + $0x80] sm:$0xff]
        %v238 = vld [vmem:[%s213 + $0x88] sm:$0xff]
        %v239 = vld [vmem:[%s213 + $0x90] sm:$0xff]
        %v240 = vld [vmem:[%s213 + $0x98] sm:$0xff]
        %v241 = vld [vmem:[%s213 + $0xa0] sm:$0xff]
        %v242 = vld [vmem:[%s213 + $0xa8] sm:$0xff]
        %v243 = vld [vmem:[%s213 + $0xb0] sm:$0xff]
        %v244 = vld [vmem:[%s213 + $0xb8] sm:$0xff]
        %v245 = vld [vmem:[%s213 + $0xc0] sm:$0xff]
        %v246 = vld [vmem:[%s213 + $0xc8] sm:$0xff]
        %v247 = vld [vmem:[%s213 + $0xd0] sm:$0xff]
        %v248 = vld [vmem:[%s213 + $0xd8] sm:$0xff]
        %v249 = vld [vmem:[%s213 + $0xe0] sm:$0xff]
        %v250 = vld [vmem:[%s213 + $0xe8] sm:$0xff]
        %v251 = vld [vmem:[%s213 + $0xf0] sm:$0xff]
        %v252 = vld [vmem:[%s213 + $0xf8] sm:$0xff]
        %v253 = vld [vmem:[%s213 + $0x100] sm:$0xff]
        %v254 = vld [vmem:[%s213 + $0x108] sm:$0xff]
        %v255 = vld [vmem:[%s213 + $0x110] sm:$0xff]
        %v256 = vld [vmem:[%s213 + $0x118] sm:$0xff]
        %v257 = vld [vmem:[%s213 + $0x120] sm:$0xff]
        %v258 = vld [vmem:[%s213 + $0x128] sm:$0xff]
        %v259 = vld [vmem:[%s213 + $0x130] sm:$0xff]
        %v260 = vld [vmem:[%s213 + $0x138] sm:$0xff]
        %v261 = vld [vmem:[%s213 + $0x140] sm:$0xff]
        %v262 = vld [vmem:[%s213 + $0x148] sm:$0xff]
        %v263 = vld [vmem:[%s213 + $0x150] sm:$0xff]
        %v264 = vld [vmem:[%s213 + $0x158] sm:$0xff]
        %v265 = vld [vmem:[%s213 + $0x160] sm:$0xff]
        %v266 = vld [vmem:[%s213 + $0x168] sm:$0xff]
        %v267 = vld [vmem:[%s213 + $0x170] sm:$0xff]
        %v268 = vld [vmem:[%s213 + $0x178] sm:$0xff]
        %v269 = vld [vmem:[%s213 + $0x180] sm:$0xff]
        %v270 = vld [vmem:[%s213 + $0x188] sm:$0xff]
        %v271 = vld [vmem:[%s213 + $0x190] sm:$0xff]
        %v272 = vld [vmem:[%s213 + $0x198] sm:$0xff]
        %v273 = vld [vmem:[%s213 + $0x1a0] sm:$0xff]
        %v274 = vld [vmem:[%s213 + $0x1a8] sm:$0xff]
        %v275 = vld [vmem:[%s213 + $0x1b0] sm:$0xff]
        %v276 = vld [vmem:[%s213 + $0x1b8] sm:$0xff]
        %v277 = vld [vmem:[%s213 + $0x1c0] sm:$0xff]
        %v278 = vld [vmem:[%s213 + $0x1c8] sm:$0xff]
        %v279 = vld [vmem:[%s213 + $0x1d0] sm:$0xff]
        %v280 = vld [vmem:[%s213 + $0x1d8] sm:$0xff]
        %v281 = vld [vmem:[%s213 + $0x1e0] sm:$0xff]
        %v282 = vld [vmem:[%s213 + $0x1e8] sm:$0xff]
        %v283 = vld [vmem:[%s213 + $0x1f0] sm:$0xff]
        %v284 = vld [vmem:[%s213 + $0x1f8] sm:$0xff]
        %v285 = vpack.c.bf16 %v222, %v221
        %v286 = vpack.c.bf16 %v224, %v223
        %v287 = vpack.c.bf16 %v226, %v225
        %v288 = vpack.c.bf16 %v228, %v227
        %v289 = vpack.c.bf16 %v230, %v229
        %v290 = vpack.c.bf16 %v232, %v231
        %v291 = vpack.c.bf16 %v234, %v233
        %v292 = vpack.c.bf16 %v236, %v235
        %v293 = vpack.c.bf16 %v238, %v237
        %v294 = vpack.c.bf16 %v240, %v239
        %v295 = vpack.c.bf16 %v242, %v241
        %v296 = vpack.c.bf16 %v244, %v243
        %v297 = vpack.c.bf16 %v246, %v245
        %v298 = vpack.c.bf16 %v248, %v247
        %v299 = vpack.c.bf16 %v250, %v249
        %v300 = vpack.c.bf16 %v252, %v251
        %v301 = vpack.c.bf16 %v254, %v253
        %v302 = vpack.c.bf16 %v256, %v255
        %v303 = vpack.c.bf16 %v258, %v257
        %v304 = vpack.c.bf16 %v260, %v259
        %v305 = vpack.c.bf16 %v262, %v261
        %v306 = vpack.c.bf16 %v264, %v263
        %v307 = vpack.c.bf16 %v266, %v265
        %v308 = vpack.c.bf16 %v268, %v267
        %v309 = vpack.c.bf16 %v270, %v269
        %v310 = vpack.c.bf16 %v272, %v271
        %v311 = vpack.c.bf16 %v274, %v273
        %v312 = vpack.c.bf16 %v276, %v275
        %v313 = vpack.c.bf16 %v278, %v277
        %v314 = vpack.c.bf16 %v280, %v279
        %v315 = vpack.c.bf16 %v282, %v281
        %v316 = vpack.c.bf16 %v284, %v283
        %v317 = vld [vmem:[%s1] sm:$0xf]
        %v318 = vld [vmem:[%s1 + $0x4] sm:$0xf]
        %v319 = vld [vmem:[%s1 + $0x8] sm:$0xf]
        %v320 = vld [vmem:[%s1 + $0xc] sm:$0xf]
        %v321 = vld [vmem:[%s2] sm:$0xff]
        %v322 = vld [vmem:[%s2 + $0x8] sm:$0xff]
        %v323 = vld [vmem:[%s2 + $0x10] sm:$0xff]
        %v324 = vld [vmem:[%s2 + $0x18] sm:$0xff]
        %326 = vset.pattern.permute.xlu0 0
        %327 = vperm.xlu0 %326, %v321
        %v328 = vpop.permute.xlu0 %327
        %331 = vset.pattern.permute.xlu0 0
        %332 = vperm.xlu0 %331, %v322
        %v333 = vpop.permute.xlu0 %332
        %336 = vset.pattern.permute.xlu0 0
        %337 = vperm.xlu0 %336, %v323
        %v338 = vpop.permute.xlu0 %337
        %341 = vset.pattern.permute.xlu0 0
        %342 = vperm.xlu0 %341, %v324
        %v343 = vpop.permute.xlu0 %342
        %v349 = vunpack.c.l.b16 %v317
        %v350 = vunpack.c.l.b16 %v318
        %v351 = vunpack.c.l.b16 %v319
        %v352 = vunpack.c.l.b16 %v320
        %v353 = vpack.c.b16 %v350, %v349
        %v354 = vpack.c.b16 %v352, %v351
        %vm355 = vcmask 130048
        %v357 = vsel %vm355, %v353, 0
        %v360 = vsel %vm355, %v354, 0
        %v363 = vsel %vm355, %v285, 0
        %v366 = vsel %vm355, %v286, 0
        %v369 = vsel %vm355, %v287, 0
        %v372 = vsel %vm355, %v288, 0
        %v375 = vsel %vm355, %v289, 0
        %v378 = vsel %vm355, %v290, 0
        %v381 = vsel %vm355, %v291, 0
        %v384 = vsel %vm355, %v292, 0
        %v387 = vsel %vm355, %v293, 0
        %v390 = vsel %vm355, %v294, 0
        %v393 = vsel %vm355, %v295, 0
        %v396 = vsel %vm355, %v296, 0
        %v399 = vsel %vm355, %v297, 0
        %v402 = vsel %vm355, %v298, 0
        %v405 = vsel %vm355, %v299, 0
        %v408 = vsel %vm355, %v300, 0
        %v411 = vsel %vm355, %v301, 0
        %v414 = vsel %vm355, %v302, 0
        %v417 = vsel %vm355, %v303, 0
        %v420 = vsel %vm355, %v304, 0
        %v423 = vsel %vm355, %v305, 0
        %v426 = vsel %vm355, %v306, 0
        %v429 = vsel %vm355, %v307, 0
        %v432 = vsel %vm355, %v308, 0
        %v435 = vsel %vm355, %v309, 0
        %v438 = vsel %vm355, %v310, 0
        %v441 = vsel %vm355, %v311, 0
        %v444 = vsel %vm355, %v312, 0
        %v447 = vsel %vm355, %v313, 0
        %v450 = vsel %vm355, %v314, 0
        %v453 = vsel %vm355, %v315, 0
        %v456 = vsel %vm355, %v316, 0
        %458 = vmatprep.subr.bf16.mxu0 0
        %459 = vmatpush1.bf16.xpose.msra.mxu0 %v363
        %460 = vmatprep.subr.bf16.mxu0 0
        %461 = vmatpush1.bf16.xpose.msra.mxu0 %v366
        %462 = vmatprep.subr.bf16.mxu0 0
        %463 = vmatpush1.bf16.xpose.msra.mxu0 %v369
        %464 = vmatprep.subr.bf16.mxu0 0
        %465 = vmatpush1.bf16.xpose.msra.mxu0 %v372
        %466 = vmatprep.subr.bf16.mxu0 0
        %467 = vmatpush1.bf16.xpose.msra.mxu0 %v375
        %468 = vmatprep.subr.bf16.mxu0 0
        %469 = vmatpush1.bf16.xpose.msra.mxu0 %v378
        %470 = vmatprep.subr.bf16.mxu0 0
        %471 = vmatpush1.bf16.xpose.msra.mxu0 %v381
        %472 = vmatprep.subr.bf16.mxu0 0
        %473 = vmatpush1.bf16.xpose.msra.mxu0 %v384
        %474 = vmatprep.subr.bf16.mxu0 0
        %475 = vmatpush1.bf16.xpose.msra.mxu0 %v387
        %476 = vmatprep.subr.bf16.mxu0 0
        %477 = vmatpush1.bf16.xpose.msra.mxu0 %v390
        %478 = vmatprep.subr.bf16.mxu0 0
        %479 = vmatpush1.bf16.xpose.msra.mxu0 %v393
        %480 = vmatprep.subr.bf16.mxu0 0
        %481 = vmatpush1.bf16.xpose.msra.mxu0 %v396
        %482 = vmatprep.subr.bf16.mxu0 0
        %483 = vmatpush1.bf16.xpose.msra.mxu0 %v399
        %484 = vmatprep.subr.bf16.mxu0 0
        %485 = vmatpush1.bf16.xpose.msra.mxu0 %v402
        %486 = vmatprep.subr.bf16.mxu0 0
        %487 = vmatpush1.bf16.xpose.msra.mxu0 %v405
        %488 = vmatprep.subr.bf16.mxu0 0
        %489 = vmatpush1.bf16.xpose.msra.mxu0 %v408
        %490 = vmatprep.mubr.bf16.mxu0 0
        %491 = vmatmul.mubr.bf16.gmra.mrb[0].mxu0 %v357
        %v492 = vpop.f32.mrb[0].mxu0
        %v493 = vadd.f32 %v328, %v492
        %v494 = vpop.f32.mrb[0].mxu0
        %v495 = vadd.f32 %v328, %v494
        %v496 = vpop.f32.mrb[0].mxu0
        %v497 = vadd.f32 %v333, %v496
        %v498 = vpop.f32.mrb[0].mxu0
        %v499 = vadd.f32 %v333, %v498
        %500 = vmatprep.mubr.bf16.mxu0 0
        %501 = vmatmul.mubr.bf16.gmra.mrb[0].mxu0 %v360
        %v502 = vpop.f32.mrb[0].mxu0
        %v503 = vadd.f32 %v338, %v502
        %v504 = vpop.f32.mrb[0].mxu0
        %v505 = vadd.f32 %v338, %v504
        %v506 = vpop.f32.mrb[0].mxu0
        %v507 = vadd.f32 %v343, %v506
        %v508 = vpop.f32.mrb[0].mxu0
        %v509 = vadd.f32 %v343, %v508
        %510 = vdwg.mxu0
        %511 = vmatprep.subr.bf16.mxu0 0
        %512 = vmatpush1.bf16.xpose.msra.mxu0 %v411
        %513 = vmatprep.subr.bf16.mxu0 0
        %514 = vmatpush1.bf16.xpose.msra.mxu0 %v414
        %515 = vmatprep.subr.bf16.mxu0 0
        %516 = vmatpush1.bf16.xpose.msra.mxu0 %v417
        %517 = vmatprep.subr.bf16.mxu0 0
        %518 = vmatpush1.bf16.xpose.msra.mxu0 %v420
        %519 = vmatprep.subr.bf16.mxu0 0
        %520 = vmatpush1.bf16.xpose.msra.mxu0 %v423
        %521 = vmatprep.subr.bf16.mxu0 0
        %522 = vmatpush1.bf16.xpose.msra.mxu0 %v426
        %523 = vmatprep.subr.bf16.mxu0 0
        %524 = vmatpush1.bf16.xpose.msra.mxu0 %v429
        %525 = vmatprep.subr.bf16.mxu0 0
        %526 = vmatpush1.bf16.xpose.msra.mxu0 %v432
        %527 = vmatprep.subr.bf16.mxu0 0
        %528 = vmatpush1.bf16.xpose.msra.mxu0 %v435
        %529 = vmatprep.subr.bf16.mxu0 0
        %530 = vmatpush1.bf16.xpose.msra.mxu0 %v438
        %531 = vmatprep.subr.bf16.mxu0 0
        %532 = vmatpush1.bf16.xpose.msra.mxu0 %v441
        %533 = vmatprep.subr.bf16.mxu0 0
        %534 = vmatpush1.bf16.xpose.msra.mxu0 %v444
        %535 = vmatprep.subr.bf16.mxu0 0
        %536 = vmatpush1.bf16.xpose.msra.mxu0 %v447
        %537 = vmatprep.subr.bf16.mxu0 0
        %538 = vmatpush1.bf16.xpose.msra.mxu0 %v450
        %539 = vmatprep.subr.bf16.mxu0 0
        %540 = vmatpush1.bf16.xpose.msra.mxu0 %v453
        %541 = vmatprep.subr.bf16.mxu0 0
        %542 = vmatpush1.bf16.xpose.msra.mxu0 %v456
        %543 = vmatprep.mubr.bf16.mxu0 0
        %544 = vmatmul.mubr.bf16.gmra.mrb[0].mxu0 %v357
        %v545 = vpop.f32.mrb[0].mxu0
        %v546 = vadd.f32 %v328, %v545
        %v547 = vpop.f32.mrb[0].mxu0
        %v548 = vadd.f32 %v328, %v547
        %v549 = vpop.f32.mrb[0].mxu0
        %v550 = vadd.f32 %v333, %v549
        %v551 = vpop.f32.mrb[0].mxu0
        %v552 = vadd.f32 %v333, %v551
        %553 = vmatprep.mubr.bf16.mxu0 0
        %554 = vmatmul.mubr.bf16.gmra.mrb[0].mxu0 %v360
        %v555 = vpop.f32.mrb[0].mxu0
        %v556 = vadd.f32 %v338, %v555
        %v557 = vpop.f32.mrb[0].mxu0
        %v558 = vadd.f32 %v338, %v557
        %v559 = vpop.f32.mrb[0].mxu0
        %v560 = vadd.f32 %v343, %v559
        %v561 = vpop.f32.mrb[0].mxu0
        %v562 = vadd.f32 %v343, %v561
        %563 = vdwg.mxu0
        %v564 = vmax.f32 %v493, 0.0
        %v565 = vmax.f32 %v495, 0.0
        %v566 = vmax.f32 %v546, 0.0
        %v567 = vmax.f32 %v548, 0.0
        %v568 = vmax.f32 %v497, 0.0
        %v569 = vmax.f32 %v499, 0.0
        %v570 = vmax.f32 %v550, 0.0
        %v571 = vmax.f32 %v552, 0.0
        %v572 = vmax.f32 %v503, 0.0
        %v573 = vmax.f32 %v505, 0.0
        %v574 = vmax.f32 %v556, 0.0
        %v575 = vmax.f32 %v558, 0.0
        %v576 = vmax.f32 %v507, 0.0
        %v577 = vmax.f32 %v509, 0.0
        %v578 = vmax.f32 %v560, 0.0
        %v579 = vmax.f32 %v562, 0.0
        %580 = vset.pattern.permute.xlu0 1
        %581 = vperm.xlu0 %580, %v321
        %v582 = vpop.permute.xlu0 %581
        %584 = vset.pattern.permute.xlu0 1
        %585 = vperm.xlu0 %584, %v322
        %v586 = vpop.permute.xlu0 %585
        %588 = vset.pattern.permute.xlu0 1
        %589 = vperm.xlu0 %588, %v323
        %v590 = vpop.permute.xlu0 %589
        %592 = vset.pattern.permute.xlu0 1
        %593 = vperm.xlu0 %592, %v324
        %v594 = vpop.permute.xlu0 %593
        %v596 = vmul.f32 %v564, %v582
        %v597 = vmul.f32 %v565, %v582
        %v598 = vmul.f32 %v566, %v582
        %v599 = vmul.f32 %v567, %v582
        %v600 = vmul.f32 %v568, %v586
        %v601 = vmul.f32 %v569, %v586
        %v602 = vmul.f32 %v570, %v586
        %v603 = vmul.f32 %v571, %v586
        %v604 = vmul.f32 %v572, %v590
        %v605 = vmul.f32 %v573, %v590
        %v606 = vmul.f32 %v574, %v590
        %v607 = vmul.f32 %v575, %v590
        %v608 = vmul.f32 %v576, %v594
        %v609 = vmul.f32 %v577, %v594
        %v610 = vmul.f32 %v578, %v594
        %v611 = vmul.f32 %v579, %v594
        %v612 = vadd.f32 %v596, %v600
        %v613 = vadd.f32 %v612, %v604
        %v614 = vadd.f32 %v613, %v608
        %v615 = vrot.slane %v614, 4
        %v616 = vadd.f32 %v614, %v615
        %v617 = vrot.slane %v616, 2
        %v618 = vadd.f32 %v616, %v617
        %v619 = vrot.slane %v618, 1
        %v620 = vadd.f32 %v618, %v619
        %v621 = vadd.f32 %v597, %v601
        %v622 = vadd.f32 %v621, %v605
        %v623 = vadd.f32 %v622, %v609
        %v624 = vrot.slane %v623, 4
        %v625 = vadd.f32 %v623, %v624
        %v626 = vrot.slane %v625, 2
        %v627 = vadd.f32 %v625, %v626
        %v628 = vrot.slane %v627, 1
        %v629 = vadd.f32 %v627, %v628
        %v630 = vadd.f32 %v598, %v602
        %v631 = vadd.f32 %v630, %v606
        %v632 = vadd.f32 %v631, %v610
        %v633 = vrot.slane %v632, 4
        %v634 = vadd.f32 %v632, %v633
        %v635 = vrot.slane %v634, 2
        %v636 = vadd.f32 %v634, %v635
        %v637 = vrot.slane %v636, 1
        %v638 = vadd.f32 %v636, %v637
        %v639 = vadd.f32 %v599, %v603
        %v640 = vadd.f32 %v639, %v607
        %v641 = vadd.f32 %v640, %v611
        %v642 = vrot.slane %v641, 4
        %v643 = vadd.f32 %v641, %v642
        %v644 = vrot.slane %v643, 2
        %v645 = vadd.f32 %v643, %v644
        %v646 = vrot.slane %v645, 1
        %v647 = vadd.f32 %v645, %v646
        %s648 = sld [smem:[#allocation2]]
        %v649 = vstv %s648
        %v650 = vadd.f32 %v620, %v649
        %v651 = vadd.f32 %v629, %v649
        %v652 = vadd.f32 %v638, %v649
        %v653 = vadd.f32 %v647, %v649
        %v654 = vxor.u32 %v650, 2147483648
        %v655 = vxor.u32 %v651, 2147483648
        %v656 = vxor.u32 %v652, 2147483648
        %v657 = vxor.u32 %v653, 2147483648
        %v658 = vmul.f32 %v654, 1.442695
        %v659 = vpow.pop %v658
        %v660 = vmul.f32 %v655, 1.442695
        %v661 = vpow.pop %v660
        %v662 = vmul.f32 %v656, 1.442695
        %v663 = vpow.pop %v662
        %v664 = vmul.f32 %v657, 1.442695
        %v665 = vpow.pop %v664
        %v666 = vadd.f32 %v659, 1.0
        %v667 = vadd.f32 %v661, 1.0
        %v668 = vadd.f32 %v663, 1.0
        %v669 = vadd.f32 %v665, 1.0
        %v670 = vrcp.pop %v666
        %v671 = vmul.f32 1.0, %v670
        %v672 = vrcp.pop %v667
        %v673 = vmul.f32 1.0, %v672
        %v674 = vrcp.pop %v668
        %v675 = vmul.f32 1.0, %v674
        %v676 = vrcp.pop %v669
        %v677 = vmul.f32 1.0, %v676
        %v682 = vcombine.low %v671, %v673
        %v683 = vcombine.low %v675, %v677
        %v685 = vunpack.c.l.s4 1966171168
        %v686 = vunpack.c.0.s8 %v685
        %v687 = vlaneseq
        %v688 = vshrl.u32 %v687, 7
        %v689 = vsub.s32 %v686, %v688
        %v690 = vrot.slane %v682, %v689
        %v692 = vunpack.c.l.s4 1966171168
        %v693 = vunpack.c.0.s8 %v692
        %v694 = vlaneseq
        %v695 = vshrl.u32 %v694, 7
        %v696 = vsub.s32 %v693, %v695
        %v697 = vrot.slane %v683, %v696
        %v698 = vcombine.low %v690, %v697
        %v700 = vunpack.c.l.s4 1966171168
        %v701 = vunpack.c.0.s8 %v700
        %v702 = vlaneseq
        %v703 = vshrl.u32 %v702, 7
        %v704 = vsub.s32 %v701, %v703
        %v705 = vrot.slane %v698, %v704
        %v707 = vlaneseq
        %vm708 = vcmp.ge.s32.totalorder %v707, 0
        %vm709 = vcmp.lt.s32.totalorder %v707, 512
        %vm710 = vmand %vm708, %vm709
        %711 = vst.msk [vmem:[%s204] sm:$0xf] %vm710, %v705
        %s712 = sand.u32 %s116, 1
        %s713 = scalar_lea.sflag [#allocation4], %s712
        %s714 = sand.u32 %s116, 1
        %s715 = smul.addr %s714, 4
        %s716 = scalar_lea.vmem [#allocation3], %s715
        // Predicated region
        $region37: #{tpu_custom_call.1} parent=35 // pred_check
          %p717 = pneg %p126
        $region38: #{tpu_custom_call.1} parent=35 // pred_check_branch
          %719 = sbr.rel (%p717) target = $region40
        $region39: #{tpu_custom_call.1} parent=35 // pred_region
          %s720 = smul.u32 4, %s19
          %s722 = ssub.s32 64, 64
          %723 = vsyncadd %s713, %s722
          %s724 = smul.addr %s720, 16
          %s725 = scalar_lea.hbm %s4, %s724
          %s727 = sshll.u32 %s716, 4
          %s728 = int_to_ptr.vmem [resolvable:$true] %s727
          %730 = dma.vmem_to_hbm [thread:$0]  %s728, 64, %s725, %s713
        $region40: #{tpu_custom_call.1} parent=35 // pred_fallthru
          _
      $region36: #{tpu_custom_call.1} parent=5 // pred_fallthru
        _
      %p731 = scmp.le.s32.totalorder 2, %s14
      // Predicated region
      $region41: #{tpu_custom_call.1} parent=5 // pred_check
        %p732 = pneg %p731
      $region42: #{tpu_custom_call.1} parent=5 // pred_check_branch
        %734 = sbr.rel (%p732) target = $region44
      $region43: #{tpu_custom_call.1} parent=5 // pred_region
        %s735 = ssub.s32 %s14, 2
        // Predicated region
        $region45: #{tpu_custom_call.1} parent=43 // pred_check
          %p736 = pneg %p132
        $region46: #{tpu_custom_call.1} parent=43 // pred_check_branch
          %738 = sbr.rel (%p736) target = $region48
        $region47: #{tpu_custom_call.1} parent=43 // pred_region
          %s739 = sand.u32 %s117, 1
          %s740 = scalar_lea.sflag [#allocation4], %s739
          %s741 = sand.u32 %s117, 1
          %s742 = smul.addr %s741, 4
          %s743 = scalar_lea.vmem [#allocation3], %s742
          %744 = dma.done %s740, 64
        $region48: #{tpu_custom_call.1} parent=43 // pred_fallthru
          _
      $region44: #{tpu_custom_call.1} parent=5 // pred_fallthru
        _
    $region6: #{tpu_custom_call.1} parent=1 // loop_footer
      %s18 = sadd.s32 1, %s14
    $region7: #{tpu_custom_call.1} parent=1 // loop_footer_branch
      %13 = sbr.rel target = $region3
    $region8: #{tpu_custom_call.1} parent=1 // loop_exit
      _
    %745 = vsyncpa [#allocation4], 1
    %s746 = scalar_lea.sflag [#allocation4], 1
    %747 = vsyncpa %s746, 1

</llo_original>
